<compile_context>
chip_gen: v6e
topology: v6e:2x2x1
jax: 0.10.0
libtpu: 0.0.40
codegen_flags: <defaults>
</compile_context>

<pallas_src>
import functools

import jax
import jax.numpy as jnp
from jax.experimental import pallas as pl
from jax.experimental.pallas import tpu as pltpu


def _round_up(x, m):
    return ((x + m - 1) // m) * m


def _sinu_rot_kernel(u_ref, v_ref, cos_tab_ref, sin_tab_ref, out_ref):
    # u_ref, v_ref:            (1, 1, W)   per-tile base rotation rows (scale folded in)
    # cos_tab_ref, sin_tab_ref:(tile_N, W) in-tile offset tables (constant block index
    #                                      -> DMA'd once, stay resident in VMEM)
    # out_ref:                 (tile_N, W)
    # sin(a+b) = sin a * cos b + cos a * sin b ; cos(a+b) = cos a * cos b - sin a * sin b
    # are both expressed as u * cos_tab + v * sin_tab with the sign folded into v.
    out_ref[...] = u_ref[0] * cos_tab_ref[...] + v_ref[0] * sin_tab_ref[...]


@functools.partial(jax.jit, static_argnames=("n", "block_rows"))
def scaled_sinu_embedding(n, inv_freq, scale, *, block_rows=None):
    """Pallas implementation of ScaledSinuEmbedding.forward for sequence length n.

    inv_freq: (dim//2,) float32 buffer, scale: (1,) float32 parameter.
    Returns (n, 2*len(inv_freq)) float32 (same width rule as the PyTorch module).
    """
    half = inv_freq.shape[0]
    dim = 2 * half  # == torch.cat((sin, cos), -1) width

    inv_freq = inv_freq.astype(jnp.float32).reshape(half)
    s = scale.astype(jnp.float32).reshape(())

    # ---- Row folding: lane-dense stores for small dim (r rows packed into lanes). ----
    r = 1
    if dim < 256:
        for cand in range(max(1, 256 // dim), 1, -1):
            if n % cand == 0:           # need r | n for the final reshape to be a pure unfold
                r = cand
                break
    W = r * dim
    n_f = n // r                        # folded row count (== n when r == 1)

    # ---- Tile rows by VMEM byte budget (not a fixed row cap). Worst case resident:
    # double-buffered output block + 2 offset tables (conservatively counted as
    # double-buffered) = 6 * block_bytes  <= ~24 MiB under a 32 MiB scoped limit. ----
    if block_rows is None:
        budget_elems = (24 * 1024 * 1024) // (6 * 4)
        block_rows = budget_elems // W
    tile_N = max(8, min(_round_up(n_f, 8), (block_rows // 8) * 8))
    grid_n = pl.cdiv(n_f, tile_N)       # ragged final block is masked by Pallas

    # ---- Angle-addition precompute (tiny: one tile of offsets + one row per tile). ----
    # logical row = base_g + off, base_g = g * tile_N * r, off in [0, tile_N * r)
    tile_rows = tile_N * r
    off = jnp.arange(tile_rows, dtype=jnp.float32)
    off_phase = off[:, None] * inv_freq[None, :]                  # (tile_rows, half)
    cos_off = jnp.cos(off_phase)
    sin_off = jnp.sin(off_phase)
    # Column layout per logical row is [sin-half | cos-half]; both halves need the same
    # cos(off*f) / sin(off*f), so the tables are the half tables tiled twice, then folded.
    cos_tab = jnp.concatenate([cos_off, cos_off], axis=-1).reshape(tile_N, W)
    sin_tab = jnp.concatenate([sin_off, sin_off], axis=-1).reshape(tile_N, W)

    base = jnp.arange(grid_n, dtype=jnp.float32) * float(tile_rows)
    base_phase = base[:, None] * inv_freq[None, :]                # (grid_n, half)
    sin_b = jnp.sin(base_phase)
    cos_b = jnp.cos(base_phase)
    u = s * jnp.concatenate([sin_b, cos_b], axis=-1)              # (grid_n, dim)
    v = s * jnp.concatenate([cos_b, -sin_b], axis=-1)
    u = jnp.tile(u, (1, r)).reshape(grid_n, 1, W)
    v = jnp.tile(v, (1, r)).reshape(grid_n, 1, W)

    out = pl.pallas_call(
        _sinu_rot_kernel,
        out_shape=jax.ShapeDtypeStruct((n_f, W), jnp.float32),
        grid=(grid_n,),
        in_specs=[
            pl.BlockSpec((1, 1, W), lambda i: (i, 0, 0)),   # u: per-tile base row
            pl.BlockSpec((1, 1, W), lambda i: (i, 0, 0)),   # v: per-tile base row
            pl.BlockSpec((tile_N, W), lambda i: (0, 0)),    # cos offset table (resident)
            pl.BlockSpec((tile_N, W), lambda i: (0, 0)),    # sin offset table (resident)
        ],
        out_specs=pl.BlockSpec((tile_N, W), lambda i: (i, 0)),
        compiler_params=pltpu.CompilerParams(
            # Independent row tiles; shards across both TensorCores where supported.
            # TODO(synk): if a v7x bundle dump shows a single core running all steps,
            # switch this axis to pltpu.CORE_PARALLEL.
            dimension_semantics=("parallel",),
            vmem_limit_bytes=32 * 1024 * 1024,
        ),
    )(u, v, cos_tab, sin_tab)

    # Unfold (n_f, r*dim) -> (n, dim); no-op when r == 1 (contiguous row-major unfold).
    return out.reshape(n, dim) if r > 1 else out


def scaled_sinu_embedding_forward(x, inv_freq, scale):
    """Mirror of the PyTorch forward: only x.shape[1] (sequence length) matters."""
    n = x.shape[1]
    return scaled_sinu_embedding(n, inv_freq, scale)


def _reference(n, inv_freq, scale):
    t = jnp.arange(n, dtype=jnp.float32)
    sinu = jnp.einsum("i,j->ij", t, inv_freq)
    emb = jnp.concatenate([jnp.sin(sinu), jnp.cos(sinu)], axis=-1)
    return emb * scale.reshape(())


if __name__ == "__main__":
    key = jax.random.PRNGKey(0)

    # (batch, seq, dim) input consistent with the module's forward (only seq matters).
    batch, seq, dim = 2, 8, 32
    scale = jnp.ones((1,), dtype=jnp.float32)            # nn.Parameter(torch.ones(1))
    inv_freq = 1.0 / (10000.0 ** (jnp.arange(0, dim, 2, dtype=jnp.float32) / dim))
    x = jax.random.normal(key, (batch, seq, dim), dtype=jnp.float32)

    out = jax.block_until_ready(scaled_sinu_embedding_forward(x, inv_freq, scale))
    ref = _reference(seq, inv_freq, scale)
    assert out.shape == (seq, dim)
    assert jnp.allclose(out, ref, atol=1e-5, rtol=1e-5)

    # Lane-aligned dim + ragged sequence length (exercises masked final block, no pad copy).
    dim2, n2 = 256, 300
    scale2 = jnp.full((1,), 0.5, dtype=jnp.float32)
    inv_freq2 = 1.0 / (10000.0 ** (jnp.arange(0, dim2, 2, dtype=jnp.float32) / dim2))
    out2 = jax.block_until_ready(scaled_sinu_embedding(n2, inv_freq2, scale2))
    assert out2.shape == (n2, dim2)
    assert jnp.allclose(out2, _reference(n2, inv_freq2, scale2), atol=1e-5, rtol=1e-5)

    # Multi-tile, row-folded path (forces grid_n > 1 so the angle-addition rotation and
    # per-tile base rows are actually exercised).
    dim3, n3 = 64, 1024
    scale3 = jnp.full((1,), 1.5, dtype=jnp.float32)
    inv_freq3 = 1.0 / (10000.0 ** (jnp.arange(0, dim3, 2, dtype=jnp.float32) / dim3))
    out3 = jax.block_until_ready(
        scaled_sinu_embedding(n3, inv_freq3, scale3, block_rows=64))
    assert out3.shape == (n3, dim3)
    assert jnp.allclose(out3, _reference(n3, inv_freq3, scale3), atol=1e-4, rtol=1e-4)

    print("KERNEL_OK")
</pallas_src>

<mosaic_0001>
module attributes {stable_mosaic.version = 11 : i64} {
  func.func @_sinu_rot_kernel(%arg0: i32, %arg1: memref<1x1x256xf32, #tpu.memory_space<vmem>>, %arg2: memref<1x1x256xf32, #tpu.memory_space<vmem>>, %arg3: memref<8x256xf32, #tpu.memory_space<vmem>>, %arg4: memref<8x256xf32, #tpu.memory_space<vmem>>, %arg5: memref<8x256xf32, #tpu.memory_space<vmem>>) attributes {dimension_semantics = [#tpu.dimension_semantics<parallel>], iteration_bounds = array<i64: 1>, scalar_prefetch = 0 : i64, scratch_operands = 0 : i64, tpu.core_type = #tpu.core_type<tc>, window_params = [{transform_indices = @transform_0, window_bounds = array<i64: 1, 1, 256>}, {transform_indices = @transform_1, window_bounds = array<i64: 1, 1, 256>}, {pipeline_mode = #tpu.pipeline_mode<synchronous>, transform_indices = @transform_2, window_bounds = array<i64: 8, 256>}, {pipeline_mode = #tpu.pipeline_mode<synchronous>, transform_indices = @transform_3, window_bounds = array<i64: 8, 256>}, {transform_indices = @transform_4, window_bounds = array<i64: 8, 256>}]} {
    %c0 = arith.constant 0 : index
    %c0_0 = arith.constant 0 : index
    %c0_1 = arith.constant 0 : index
    %0 = vector.load %arg1[%c0, %c0_0, %c0_1] : memref<1x1x256xf32, #tpu.memory_space<vmem>>, vector<1x1x256xf32>
    %1 = vector.shape_cast %0 : vector<1x1x256xf32> to vector<1x256xf32>
    %c0_2 = arith.constant 0 : index
    %c0_3 = arith.constant 0 : index
    %2 = vector.load %arg3[%c0_2, %c0_3] : memref<8x256xf32, #tpu.memory_space<vmem>>, vector<8x256xf32>
    %3 = vector.broadcast %1 : vector<1x256xf32> to vector<8x256xf32>
    %4 = arith.mulf %3, %2 : vector<8x256xf32>
    %c0_4 = arith.constant 0 : index
    %c0_5 = arith.constant 0 : index
    %c0_6 = arith.constant 0 : index
    %5 = vector.load %arg2[%c0_4, %c0_5, %c0_6] : memref<1x1x256xf32, #tpu.memory_space<vmem>>, vector<1x1x256xf32>
    %6 = vector.shape_cast %5 : vector<1x1x256xf32> to vector<1x256xf32>
    %c0_7 = arith.constant 0 : index
    %c0_8 = arith.constant 0 : index
    %7 = vector.load %arg4[%c0_7, %c0_8] : memref<8x256xf32, #tpu.memory_space<vmem>>, vector<8x256xf32>
    %8 = vector.broadcast %6 : vector<1x256xf32> to vector<8x256xf32>
    %9 = arith.mulf %8, %7 : vector<8x256xf32>
    %10 = arith.addf %4, %9 : vector<8x256xf32>
    %c0_9 = arith.constant 0 : index
    %c0_10 = arith.constant 0 : index
    %11 = vector.load %arg5[%c0_9, %c0_10] : memref<8x256xf32, #tpu.memory_space<vmem>>, vector<8x256xf32>
    tpu.vector_store %arg5[%c0_9, %c0_10], %10 {strides = array<i32>} : memref<8x256xf32, #tpu.memory_space<vmem>>, vector<8x256xf32>,
    return
  }
  func.func @transform_0(%arg0: i32) -> (i32, i32, i32) {
    %c0_i32 = arith.constant 0 : i32
    %c0_i32_0 = arith.constant 0 : i32
    %c0_i32_1 = arith.constant 0 : i32
    return %arg0, %c0_i32, %c0_i32_0 : i32, i32, i32
  }
  func.func @transform_1(%arg0: i32) -> (i32, i32, i32) {
    %c0_i32 = arith.constant 0 : i32
    %c0_i32_0 = arith.constant 0 : i32
    %c0_i32_1 = arith.constant 0 : i32
    return %arg0, %c0_i32, %c0_i32_0 : i32, i32, i32
  }
  func.func @transform_2(%arg0: i32) -> (i32, i32) {
    %c0_i32 = arith.constant 0 : i32
    %c0_i32_0 = arith.constant 0 : i32
    %c0_i32_1 = arith.constant 0 : i32
    return %c0_i32, %c0_i32_0 : i32, i32
  }
  func.func @transform_3(%arg0: i32) -> (i32, i32) {
    %c0_i32 = arith.constant 0 : i32
    %c0_i32_0 = arith.constant 0 : i32
    %c0_i32_1 = arith.constant 0 : i32
    return %c0_i32, %c0_i32_0 : i32, i32
  }
  func.func @transform_4(%arg0: i32) -> (i32, i32) {
    %c0_i32 = arith.constant 0 : i32
    %c0_i32_0 = arith.constant 0 : i32
    return %arg0, %c0_i32 : i32, i32
  }
}

</mosaic_0001>

<llo_original>
// kernel: scaled_sinu_embedding.1
$region0: #{scaled_sinu_embedding.1}
  #allocation0 [shape = 'u32[]', space=smem, size = 0x4, offset = 0x4, fixed_abs, tag = 'smem constant byte address 0x4 - core index']
  #allocation1 [shape = 'u32[144,128]{1,0:T(1,128)}', space=vmem, size = 0x12000, scoped, tag = 'internal scratch']
  %s0 = inlined_call_operand.vmem [shape: f32[1,1,256], index: 0, kind: input, shape index: {}]
  %s1 = inlined_call_operand.vmem [shape: f32[1,1,256], index: 1, kind: input, shape index: {}]
  %s2 = inlined_call_operand.vmem [shape: f32[8,256], index: 2, kind: input, shape index: {}]
  %s3 = inlined_call_operand.vmem [shape: f32[8,256], index: 3, kind: input, shape index: {}]
  %s4 = inlined_call_operand.vmem [shape: f32[1,256], index: 4, kind: output, shape index: {}]
  %s5 = sld [smem:[#allocation0]]
  $region56: #{scaled_sinu_embedding.1} parent=0
    _
  %s7 = ssub.s32 1, %s5
  %s8 = scalar_select 0, %s7, %s5
  $region1: #{scaled_sinu_embedding.1} parent=0
    #allocation2 [shape = 'u8[8192]{0}', space=vmem, size = 0x2000, scoped, tag = 'output window, operand 0, single buffered']
    // Predicated region
    $region2: #{scaled_sinu_embedding.1} parent=1 // pred_check
      _
    $region3: #{scaled_sinu_embedding.1} parent=1 // pred_check_branch
      %10 = sbr.rel (0) target = $region5
    $region4: #{scaled_sinu_embedding.1} parent=1 // pred_region
      _
    $region5: #{scaled_sinu_embedding.1} parent=1 // pred_fallthru
      _
    // Predicated region
    $region6: #{scaled_sinu_embedding.1} parent=1 // pred_check
      _
    $region7: #{scaled_sinu_embedding.1} parent=1 // pred_check_branch
      %12 = sbr.rel (0) target = $region9
    $region8: #{scaled_sinu_embedding.1} parent=1 // pred_region
      _
    $region9: #{scaled_sinu_embedding.1} parent=1 // pred_fallthru
      _
    // Predicated region
    $region10: #{scaled_sinu_embedding.1} parent=1 // pred_check
      _
    $region11: #{scaled_sinu_embedding.1} parent=1 // pred_check_branch
      %14 = sbr.rel (0) target = $region13
    $region12: #{scaled_sinu_embedding.1} parent=1 // pred_region
      _
    $region13: #{scaled_sinu_embedding.1} parent=1 // pred_fallthru
      _
    // Predicated region
    $region14: #{scaled_sinu_embedding.1} parent=1 // pred_check
      _
    $region15: #{scaled_sinu_embedding.1} parent=1 // pred_check_branch
      %16 = sbr.rel (0) target = $region17
    $region16: #{scaled_sinu_embedding.1} parent=1 // pred_region
      _
    $region17: #{scaled_sinu_embedding.1} parent=1 // pred_fallthru
      _
    %v17 = vld [vmem:[%s0] sm:$0x3]
    %v18 = vld [vmem:[%s2] sm:$0xff]
    %v19 = vld [vmem:[%s2 + $0x8] sm:$0xff]
    %v21 = vlaneseq
    %v22 = vshrl.u32 %v21, 7
    %v23 = vsub.s32 0, %v22
    %v24 = vrot.slane %v17, %v23
    %v25 = vlaneseq
    %v26 = vshrl.u32 %v25, 7
    %v27 = vsub.s32 1, %v26
    %v28 = vrot.slane %v17, %v27
    %v31 = vmul.f32 %v24, %v18
    %v32 = vmul.f32 %v28, %v19
    %v33 = vld [vmem:[%s1] sm:$0x3]
    %v34 = vld [vmem:[%s3] sm:$0xff]
    %v35 = vld [vmem:[%s3 + $0x8] sm:$0xff]
    %v37 = vlaneseq
    %v38 = vshrl.u32 %v37, 7
    %v39 = vsub.s32 0, %v38
    %v40 = vrot.slane %v33, %v39
    %v41 = vlaneseq
    %v42 = vshrl.u32 %v41, 7
    %v43 = vsub.s32 1, %v42
    %v44 = vrot.slane %v33, %v43
    %v47 = vmul.f32 %v40, %v34
    %v48 = vmul.f32 %v44, %v35
    %v49 = vadd.f32 %v31, %v47
    %v50 = vadd.f32 %v32, %v48
    %v53 = vcombine.low %v49, %v50
    %v54 = vcombine.high %v49, %v50
    %v56 = vunpack.c.l.s4 1966171168
    %v57 = vunpack.c.0.s8 %v56
    %v58 = vlaneseq
    %v59 = vshrl.u32 %v58, 7
    %v60 = vsub.s32 %v57, %v59
    %v61 = vrot.slane %v53, %v60
    %v63 = vunpack.c.l.s4 1966171168
    %v64 = vunpack.c.0.s8 %v63
    %v65 = vlaneseq
    %v66 = vshrl.u32 %v65, 7
    %v67 = vsub.s32 %v64, %v66
    %v68 = vrot.slane %v54, %v67
    %v69 = vcombine.high %v61, %v61
    %v70 = vcombine.high %v68, %v68
    %v72 = vunpack.c.l.s4 1966171168
    %v73 = vunpack.c.0.s8 %v72
    %v74 = vlaneseq
    %v75 = vshrl.u32 %v74, 7
    %v76 = vsub.s32 %v73, %v75
    %v77 = vrot.slane %v61, %v76
    %v79 = vunpack.c.l.s4 1966171168
    %v80 = vunpack.c.0.s8 %v79
    %v81 = vlaneseq
    %v82 = vshrl.u32 %v81, 7
    %v83 = vsub.s32 %v80, %v82
    %v84 = vrot.slane %v68, %v83
    %v86 = vunpack.c.l.s4 1966171168
    %v87 = vunpack.c.0.s8 %v86
    %v88 = vlaneseq
    %v89 = vshrl.u32 %v88, 7
    %v90 = vsub.s32 %v87, %v89
    %v91 = vrot.slane %v69, %v90
    %v93 = vunpack.c.l.s4 1966171168
    %v94 = vunpack.c.0.s8 %v93
    %v95 = vlaneseq
    %v96 = vshrl.u32 %v95, 7
    %v97 = vsub.s32 %v94, %v96
    %v98 = vrot.slane %v70, %v97
    %v99 = vcombine.high %v77, %v77
    %v100 = vcombine.high %v84, %v84
    %v101 = vcombine.high %v91, %v91
    %v102 = vcombine.high %v98, %v98
    %v111 = vlaneseq
    %vm112 = vcmp.ge.s32.totalorder %v111, 0
    %vm113 = vcmp.lt.s32.totalorder %v111, 256
    %vm114 = vmand %vm112, %vm113
    %115 = vst.msk [vmem:[#allocation2] sm:$0x3] %vm114, %v77
    %116 = vst.msk [vmem:[#allocation2 + $0x2] sm:$0x3] %vm114, %v91
    %117 = vst.msk [vmem:[#allocation2 + $0x4] sm:$0x3] %vm114, %v99
    %118 = vst.msk [vmem:[#allocation2 + $0x6] sm:$0x3] %vm114, %v101
    %119 = vst.msk [vmem:[#allocation2 + $0x8] sm:$0x3] %vm114, %v84
    %120 = vst.msk [vmem:[#allocation2 + $0xa] sm:$0x3] %vm114, %v98
    %121 = vst.msk [vmem:[#allocation2 + $0xc] sm:$0x3] %vm114, %v100
    %122 = vst.msk [vmem:[#allocation2 + $0xe] sm:$0x3] %vm114, %v102
    // Predicated region
    $region18: #{scaled_sinu_embedding.1} parent=1 // pred_check
      _
    $region19: #{scaled_sinu_embedding.1} parent=1 // pred_check_branch
      %124 = sbr.rel (0) target = $region21
    $region20: #{scaled_sinu_embedding.1} parent=1 // pred_region
      // Predicated region
      $region22: #{scaled_sinu_embedding.1} parent=20 // pred_check
        _
      $region23: #{scaled_sinu_embedding.1} parent=20 // pred_check_branch
        %126 = sbr.rel (0) target = $region25
      $region24: #{scaled_sinu_embedding.1} parent=20 // pred_region
        // Predicated region
        $region26: #{scaled_sinu_embedding.1} parent=24 // pred_check
          _
        $region27: #{scaled_sinu_embedding.1} parent=24 // pred_check_branch
          %128 = sbr.rel target = $region29
        $region28: #{scaled_sinu_embedding.1} parent=24 // pred_region
          // Predicated region
          $region41: #{scaled_sinu_embedding.1} parent=28 // pred_check
            _
          $region42: #{scaled_sinu_embedding.1} parent=28 // pred_check_branch
            %144 = sbr.rel (0) target = $region44
          $region43: #{scaled_sinu_embedding.1} parent=28 // pred_region
            %s146 = ssub.s32 4, 1
            loop: start=0, step=1, limit=1
            $region45: #{scaled_sinu_embedding.1} parent=43 // loop_pre_header
              _
            $region46: #{scaled_sinu_embedding.1} parent=43 // loop_header
              %s148 = sphi 0, %s152
              %p149 = scmp.ge.s32.totalorder %s148, 1
              %s153 = sphi [#allocation2], [#allocation2]
              %s154 = sphi %s4, %s4
            $region47: #{scaled_sinu_embedding.1} parent=43 // loop_header_branch
              %151 = sbr.rel (%p149) target = $region51
            $region48: #{scaled_sinu_embedding.1} parent=43 // loop_body
              %v155 = vld [vmem:[%s153] sm:%s146]
              %156 = vst [vmem:[%s154] sm:%s146] %v155
            $region49: #{scaled_sinu_embedding.1} parent=43 // loop_footer
              %s152 = sadd.s32 1, %s148
            $region50: #{scaled_sinu_embedding.1} parent=43 // loop_footer_branch
              %147 = sbr.rel target = $region46
            $region51: #{scaled_sinu_embedding.1} parent=43 // loop_exit
              _
          $region44: #{scaled_sinu_embedding.1} parent=28 // pred_fallthru
            _
        $region29: #{scaled_sinu_embedding.1} parent=24 // pred_fallthru
          _
        // Predicated region
        $region30: #{scaled_sinu_embedding.1} parent=24 // pred_check
          _
        $region31: #{scaled_sinu_embedding.1} parent=24 // pred_check_branch
          %130 = sbr.rel (0) target = $region33
        $region32: #{scaled_sinu_embedding.1} parent=24 // pred_region
          %s132 = ssub.s32 4, 1
          loop: start=0, step=1, limit=1
          $region34: #{scaled_sinu_embedding.1} parent=32 // loop_pre_header
            _
          $region35: #{scaled_sinu_embedding.1} parent=32 // loop_header
            %s134 = sphi 0, %s138
            %p135 = scmp.ge.s32.totalorder %s134, 1
            %s139 = sphi [#allocation2], [#allocation2]
            %s140 = sphi %s4, %s4
          $region36: #{scaled_sinu_embedding.1} parent=32 // loop_header_branch
            %137 = sbr.rel (%p135) target = $region40
          $region37: #{scaled_sinu_embedding.1} parent=32 // loop_body
            %v141 = vld [vmem:[%s139] sm:%s132]
            %142 = vst [vmem:[%s140] sm:%s132] %v141
          $region38: #{scaled_sinu_embedding.1} parent=32 // loop_footer
            %s138 = sadd.s32 1, %s134
          $region39: #{scaled_sinu_embedding.1} parent=32 // loop_footer_branch
            %133 = sbr.rel target = $region35
          $region40: #{scaled_sinu_embedding.1} parent=32 // loop_exit
            _
        $region33: #{scaled_sinu_embedding.1} parent=24 // pred_fallthru
          _
      $region25: #{scaled_sinu_embedding.1} parent=20 // pred_fallthru
        _
      %157 = vnop
    $region21: #{scaled_sinu_embedding.1} parent=1 // pred_fallthru
      _
    // Predicated region
    $region52: #{scaled_sinu_embedding.1} parent=1 // pred_check
      _
    $region53: #{scaled_sinu_embedding.1} parent=1 // pred_check_branch
      %159 = sbr.rel (0) target = $region55
    $region54: #{scaled_sinu_embedding.1} parent=1 // pred_region
      _
    $region55: #{scaled_sinu_embedding.1} parent=1 // pred_fallthru
      _

</llo_original>
